<compile_context>
chip_gen: v5e
topology: v5e:2x2
jax: 0.10.0
libtpu: 0.0.40
codegen_flags: <defaults>
</compile_context>

<pallas_src>
import functools

import jax
import jax.numpy as jnp
from jax.experimental import pallas as pl
from jax.experimental.pallas import tpu as pltpu


def _round_up(x, m):
    return (x + m - 1) // m * m


def msg_kernel(feat_ref, wpre_ref, bpre_ref, msg_ref):
    """msg = relu(feats @ W_pre + b_pre), one edge tile per grid step (bf16 MXU, f32 acc)."""
    acc = jnp.dot(feat_ref[...], wpre_ref[...], preferred_element_type=jnp.float32)
    msg_ref[...] = jnp.maximum(acc + bpre_ref[...], 0.0).astype(msg_ref.dtype)


def aggregate_kernel(dst_ref, msg_ref, wupd_ref, bupd_ref, h_ref, z_acc, *, deg_lane):
    """z[v] = mean of msg over in-edges of v (via in-kernel one-hot @ msg), then
    h = relu(z @ W_upd + b_upd).  Grid: (node tiles [parallel], edge tiles [reduction])."""
    tile_n = h_ref.shape[0]
    tile_e = msg_ref.shape[0]
    ni = pl.program_id(0)
    ei = pl.program_id(1)

    @pl.when(ei == 0)
    def _init():
        z_acc[...] = jnp.zeros_like(z_acc)

    # one-hot block built in-kernel: onehot[r, e] = 1 iff dst[e] - node_tile_offset == r.
    # Padded edges carry dst = -1 and never match.  The offset is applied to the
    # (1, tile_e) dst row (cheap) instead of the (tile_n, tile_e) iota.
    shifted = dst_ref[...] - ni * tile_n                                   # (1, tile_e)
    row_ids = jax.lax.broadcasted_iota(jnp.int32, (tile_n, tile_e), 0)     # (tile_n, tile_e)
    onehot = (row_ids == shifted).astype(jnp.bfloat16)

    # Sum of messages per node; the ones-column of msg makes z_acc[:, deg_lane]
    # the in-degree, riding for free on the same MXU contraction.
    z_acc[...] += jnp.dot(onehot, msg_ref[...], preferred_element_type=jnp.float32)

    @pl.when(ei == pl.num_programs(1) - 1)
    def _finalize():
        z = z_acc[...]
        deg = z[:, deg_lane:deg_lane + 1]                                  # (tile_n, 1)
        inv = jnp.where(deg > 0.0, 1.0 / jnp.maximum(deg, 1.0), 0.0)       # exact mean
        zm = (z * inv).astype(jnp.bfloat16)
        h = jnp.dot(zm, wupd_ref[...], preferred_element_type=jnp.float32) + bupd_ref[...]
        h_ref[...] = jnp.maximum(h, 0.0)


def mp_layer_forward(y, x, src, dst, w_pre, b_pre, w_upd, b_upd, reverse,
                     tile_n=256, tile_e=2048):
    """y: (N, node_dim) node feats, x: (E, edge_dim) edge feats, src/dst: (E,) int32."""
    if reverse:
        src, dst = dst, src  # dgl.reverse(g, copy_edata=True)

    n_nodes, node_dim = y.shape
    n_edges, edge_dim = x.shape
    d_in = node_dim + edge_dim
    out_dim = w_upd.shape[1]

    if n_edges == 0:
        # no in-edges anywhere -> z = 0 -> h = relu(b_upd)
        h0 = jnp.maximum(b_upd.astype(jnp.float32), 0.0)
        return jnp.broadcast_to(h0[None, :], (n_nodes, out_dim))

    # lane-pad feature dims so every matmul and the output store are full 128-wide;
    # the msg width reserves one extra lane (index d_in) to carry the in-degree.
    d_feat_pad = _round_up(d_in, 128)
    d_msg_pad = _round_up(d_in + 1, 128)
    out_pad = _round_up(out_dim, 128)

    # adaptive tile sizes (respect (8,128)/(16,128) tiling; don't over-pad tiny graphs)
    tile_n = min(tile_n, _round_up(n_nodes, 8))
    tile_e = min(tile_e, _round_up(n_edges, 128))
    n_pad = _round_up(n_nodes, tile_n)
    e_pad = _round_up(n_edges, tile_e)

    # glue: gather source-node feats + concat edge feats, done directly in bf16.
    # TODO(synk): fuse the y[src] gather into msg_kernel via a scalar-prefetched
    # src table / manual DMA gather to remove this materialization entirely.
    feats = jnp.concatenate([y.astype(jnp.bfloat16)[src], x.astype(jnp.bfloat16)], axis=1)
    feats = jnp.pad(feats, ((0, e_pad - n_edges), (0, d_feat_pad - d_in)))   # (E_pad, Dfeat_pad)

    # destinations, padded with -1 so padded edges never hit any node row
    dst_p = jnp.pad(dst.astype(jnp.int32), (0, e_pad - n_edges),
                    constant_values=-1).reshape(1, e_pad)

    # zero-padded parameters; b_pre lane d_in is set to 1.0 so msg carries a
    # ones-column (feats/W_pre padded columns are zero -> relu(0 + 1) = 1).
    w_pre_p = jnp.zeros((d_feat_pad, d_msg_pad), jnp.float32)
    w_pre_p = w_pre_p.at[:d_in, :d_in].set(w_pre.astype(jnp.float32)).astype(jnp.bfloat16)
    b_pre_p = jnp.zeros((1, d_msg_pad), jnp.float32)
    b_pre_p = b_pre_p.at[0, :d_in].set(b_pre.astype(jnp.float32))
    b_pre_p = b_pre_p.at[0, d_in].set(1.0)

    w_upd_p = jnp.zeros((d_msg_pad, out_pad), jnp.float32)
    w_upd_p = w_upd_p.at[:d_in, :out_dim].set(w_upd.astype(jnp.float32)).astype(jnp.bfloat16)
    b_upd_p = jnp.zeros((1, out_pad), jnp.float32)
    b_upd_p = b_upd_p.at[0, :out_dim].set(b_upd.astype(jnp.float32))

    # ---- kernel 1: per-edge messages, computed exactly once over the edge axis ----
    msg = pl.pallas_call(
        msg_kernel,
        out_shape=jax.ShapeDtypeStruct((e_pad, d_msg_pad), jnp.bfloat16),
        grid_spec=pltpu.PrefetchScalarGridSpec(
            num_scalar_prefetch=0,
            grid=(e_pad // tile_e,),
            in_specs=[
                pl.BlockSpec((tile_e, d_feat_pad), lambda ei: (ei, 0)),   # edge inputs
                pl.BlockSpec((d_feat_pad, d_msg_pad), lambda ei: (0, 0)),  # W_pre
                pl.BlockSpec((1, d_msg_pad), lambda ei: (0, 0)),           # b_pre (+degree lane)
            ],
            out_specs=pl.BlockSpec((tile_e, d_msg_pad), lambda ei: (ei, 0)),
        ),
        compiler_params=pltpu.CompilerParams(
            dimension_semantics=("parallel",),
            vmem_limit_bytes=32 * 1024 * 1024,
        ),
    )(feats, w_pre_p, b_pre_p)

    # ---- kernel 2: one-hot aggregation over edge tiles + node update ----
    grid = (n_pad // tile_n, e_pad // tile_e)  # (node tiles [parallel], edge tiles [reduction, last])

    h_pad = pl.pallas_call(
        functools.partial(aggregate_kernel, deg_lane=d_in),
        out_shape=jax.ShapeDtypeStruct((n_pad, out_pad), jnp.float32),
        grid_spec=pltpu.PrefetchScalarGridSpec(
            num_scalar_prefetch=0,
            grid=grid,
            in_specs=[
                pl.BlockSpec((1, tile_e), lambda ni, ei: (0, ei)),          # dst ids
                pl.BlockSpec((tile_e, d_msg_pad), lambda ni, ei: (ei, 0)),  # messages (bf16)
                pl.BlockSpec((d_msg_pad, out_pad), lambda ni, ei: (0, 0)),  # W_upd
                pl.BlockSpec((1, out_pad), lambda ni, ei: (0, 0)),          # b_upd
            ],
            out_specs=pl.BlockSpec((tile_n, out_pad), lambda ni, ei: (ni, 0)),
            scratch_shapes=[
                pltpu.VMEM((tile_n, d_msg_pad), jnp.float32),   # z accumulator (+degree lane)
            ],
        ),
        compiler_params=pltpu.CompilerParams(
            dimension_semantics=("parallel", "arbitrary"),
            vmem_limit_bytes=32 * 1024 * 1024,   # fits v7x's smaller scoped VMEM budget
        ),
    )(dst_p, msg, w_upd_p, b_upd_p)

    return h_pad[:n_nodes, :out_dim]


def _ref_forward(y, x, src, dst, w_pre, b_pre, w_upd, b_upd, reverse):
    """pure-JAX f32 reference of the same semantics."""
    if reverse:
        src, dst = dst, src
    feats = jnp.concatenate([y[src], x], axis=1)
    msg = jnp.maximum(feats @ w_pre + b_pre, 0.0)
    n = y.shape[0]
    summed = jax.ops.segment_sum(msg, dst, num_segments=n)
    cnt = jax.ops.segment_sum(jnp.ones((msg.shape[0],), msg.dtype), dst,
                              num_segments=n)
    z = jnp.where(cnt[:, None] > 0, summed / jnp.maximum(cnt[:, None], 1.0), 0.0)
    return jnp.maximum(z @ w_upd + b_upd, 0.0)


if __name__ == "__main__":
    key = jax.random.PRNGKey(0)

    def run_case(n_nodes, n_edges, node_dim, edge_dim, out_dim, reverse,
                 tile_n, tile_e, case_key):
        d_in = node_dim + edge_dim
        ks = jax.random.split(case_key, 8)
        y = jax.random.normal(ks[0], (n_nodes, node_dim), dtype=jnp.float32)
        x = jax.random.normal(ks[1], (n_edges, edge_dim), dtype=jnp.float32)
        src = jax.random.randint(ks[2], (n_edges,), 0, n_nodes, dtype=jnp.int32)
        dst = jax.random.randint(ks[3], (n_edges,), 0, n_nodes, dtype=jnp.int32)

        # PyTorch-Linear-style uniform init, stored as (in, out)
        bnd = 1.0 / (d_in ** 0.5)
        w_pre = jax.random.uniform(ks[4], (d_in, d_in), minval=-bnd, maxval=bnd,
                                   dtype=jnp.float32)
        b_pre = jax.random.uniform(ks[5], (d_in,), minval=-bnd, maxval=bnd,
                                   dtype=jnp.float32)
        w_upd = jax.random.uniform(ks[6], (d_in, out_dim), minval=-bnd, maxval=bnd,
                                   dtype=jnp.float32)
        b_upd = jax.random.uniform(ks[7], (out_dim,), minval=-bnd, maxval=bnd,
                                   dtype=jnp.float32)

        h = mp_layer_forward(y, x, src, dst, w_pre, b_pre, w_upd, b_upd, reverse,
                             tile_n=tile_n, tile_e=tile_e)
        h = jax.block_until_ready(h)

        h_ref = _ref_forward(y, x, src, dst, w_pre, b_pre, w_upd, b_upd, reverse)
        assert h.shape == (n_nodes, out_dim)
        err = jnp.max(jnp.abs(h - h_ref))
        assert jnp.allclose(h, h_ref, atol=5e-2, rtol=5e-2), f"max abs err {err}"

    k1, k2, k3 = jax.random.split(key, 3)
    # small case matching the module's typical dims (single-tile grid)
    run_case(n_nodes=8, n_edges=16, node_dim=16, edge_dim=16, out_dim=32,
             reverse=True, tile_n=256, tile_e=2048, case_key=k1)
    # multi-tile case exercising multiple node tiles and the edge-axis reduction
    run_case(n_nodes=256, n_edges=512, node_dim=16, edge_dim=16, out_dim=32,
             reverse=False, tile_n=128, tile_e=256, case_key=k2)
    # odd sizes exercising node/edge padding with default tile sizes
    run_case(n_nodes=300, n_edges=900, node_dim=16, edge_dim=16, out_dim=32,
             reverse=True, tile_n=256, tile_e=2048, case_key=k3)

    print("KERNEL_OK")
</pallas_src>

<mosaic_0001>
module attributes {stable_mosaic.version = 11 : i64} {
  func.func @msg_kernel(%arg0: i32, %arg1: memref<128x128xbf16, #tpu.memory_space<vmem>>, %arg2: memref<128x128xbf16, #tpu.memory_space<vmem>>, %arg3: memref<1x128xf32, #tpu.memory_space<vmem>>, %arg4: memref<128x128xbf16, #tpu.memory_space<vmem>>) attributes {dimension_semantics = [#tpu.dimension_semantics<parallel>], iteration_bounds = array<i64: 1>, scalar_prefetch = 0 : i64, scratch_operands = 0 : i64, tpu.core_type = #tpu.core_type<tc>, window_params = [{transform_indices = @transform_0, window_bounds = array<i64: 128, 128>}, {pipeline_mode = #tpu.pipeline_mode<synchronous>, transform_indices = @transform_1, window_bounds = array<i64: 128, 128>}, {pipeline_mode = #tpu.pipeline_mode<synchronous>, transform_indices = @transform_2, window_bounds = array<i64: 1, 128>}, {transform_indices = @transform_3, window_bounds = array<i64: 128, 128>}]} {
    %c0 = arith.constant 0 : index
    %c0_0 = arith.constant 0 : index
    %0 = vector.load %arg1[%c0, %c0_0] : memref<128x128xbf16, #tpu.memory_space<vmem>>, vector<128x128xbf16>
    %c0_1 = arith.constant 0 : index
    %c0_2 = arith.constant 0 : index
    %1 = vector.load %arg2[%c0_1, %c0_2] : memref<128x128xbf16, #tpu.memory_space<vmem>>, vector<128x128xbf16>
    %cst = arith.constant dense<0.000000e+00> : vector<128x128xf32>
    %2 = tpu.matmul %0, %1, %cst {dimension_numbers = #tpu.dot_dimension_numbers<[1], [0], [0], [1], [0, 0, 1, 1], [], []>} : vector<128x128xbf16>, vector<128x128xbf16>, vector<128x128xf32> -> vector<128x128xf32>
    %c0_3 = arith.constant 0 : index
    %c0_4 = arith.constant 0 : index
    %3 = vector.load %arg3[%c0_3, %c0_4] : memref<1x128xf32, #tpu.memory_space<vmem>>, vector<1x128xf32>
    %4 = vector.broadcast %3 : vector<1x128xf32> to vector<128x128xf32>
    %5 = arith.addf %2, %4 : vector<128x128xf32>
    %cst_5 = arith.constant 0.000000e+00 : f32
    %6 = vector.broadcast %cst_5 : f32 to vector<128x128xf32>
    %7 = arith.maximumf %5, %6 : vector<128x128xf32>
    %8 = arith.truncf %7 : vector<128x128xf32> to vector<128x128xbf16>
    %c0_6 = arith.constant 0 : index
    %c0_7 = arith.constant 0 : index
    %9 = vector.load %arg4[%c0_6, %c0_7] : memref<128x128xbf16, #tpu.memory_space<vmem>>, vector<128x128xbf16>
    tpu.vector_store %arg4[%c0_6, %c0_7], %8 {strides = array<i32>} : memref<128x128xbf16, #tpu.memory_space<vmem>>, vector<128x128xbf16>,
    return
  }
  func.func @transform_0(%arg0: i32) -> (i32, i32) {
    %c0_i32 = arith.constant 0 : i32
    %c0_i32_0 = arith.constant 0 : i32
    return %arg0, %c0_i32 : i32, i32
  }
  func.func @transform_1(%arg0: i32) -> (i32, i32) {
    %c0_i32 = arith.constant 0 : i32
    %c0_i32_0 = arith.constant 0 : i32
    %c0_i32_1 = arith.constant 0 : i32
    return %c0_i32, %c0_i32_0 : i32, i32
  }
  func.func @transform_2(%arg0: i32) -> (i32, i32) {
    %c0_i32 = arith.constant 0 : i32
    %c0_i32_0 = arith.constant 0 : i32
    %c0_i32_1 = arith.constant 0 : i32
    return %c0_i32, %c0_i32_0 : i32, i32
  }
  func.func @transform_3(%arg0: i32) -> (i32, i32) {
    %c0_i32 = arith.constant 0 : i32
    %c0_i32_0 = arith.constant 0 : i32
    return %arg0, %c0_i32 : i32, i32
  }
}

</mosaic_0001>

<llo_original>
// kernel: tpu_custom_call.1
$region0: #{tpu_custom_call.1}
  #allocation0 [shape = 'u32[]', space=smem, size = 0x4, offset = 0x4, fixed_abs, tag = 'smem constant byte address 0x4 - core index']
  #allocation1 [shape = 'u32[72,128]{1,0:T(1,128)}', space=vmem, size = 0x9000, scoped, tag = 'internal scratch']
  %s0 = inlined_call_operand.hbm [shape: bf16[128,128], index: 0, kind: input, shape index: {}]
  %s1 = inlined_call_operand.hbm [shape: bf16[128,128], index: 1, kind: input, shape index: {}]
  %s2 = inlined_call_operand.vmem [shape: f32[1,128], index: 2, kind: input, shape index: {}]
  %s3 = inlined_call_operand.hbm [shape: bf16[128,128], index: 3, kind: output, shape index: {}]
  %s4 = sld [smem:[#allocation0]]
  $region30: #{tpu_custom_call.1} parent=0
    _
  %s6 = ssub.s32 1, %s4
  %s7 = scalar_select 0, %s6, %s4
  $region1: #{tpu_custom_call.1} parent=0
    #allocation2 [shape = 'u8[32768]{0}', space=vmem, size = 0x8000, scoped, tag = 'input window, operand 0, single buffered']
    #allocation3 [shape = 's32[1]{0}', space=sflag, size = 0x4, scoped, tag = 'scoped memory for tpu_custom_call.1']
    #allocation4 [shape = 's32[1]{0}', space=sflag, size = 0x4, scoped, tag = 'scoped memory for tpu_custom_call.1']
    #allocation5 [shape = 'u8[32768]{0}', space=vmem, size = 0x8000, scoped, tag = 'input window, operand 1, single buffered']
    #allocation6 [shape = 's32[1]{0}', space=sflag, size = 0x4, scoped, tag = 'scoped memory for tpu_custom_call.1']
    #allocation7 [shape = 'u8[32768]{0}', space=vmem, size = 0x8000, scoped, tag = 'output window, operand 0, single buffered']
    %8 = vsyncpa [#allocation3], 0
    %9 = vsyncpa [#allocation6], 0
    %10 = vsyncpa [#allocation4], 0
    // Predicated region
    $region2: #{tpu_custom_call.1} parent=1 // pred_check
      _
    $region3: #{tpu_custom_call.1} parent=1 // pred_check_branch
      %12 = sbr.rel (0) target = $region5
    $region4: #{tpu_custom_call.1} parent=1 // pred_region
      %14 = vsyncadd [#allocation3], 0
      %s15 = sshll.u32 %s0, 4
      %s16 = int_to_ptr.hbm [resolvable:$true] %s15
      %s17 = sshll.u32 [#allocation2], 4
      %s18 = int_to_ptr.vmem [resolvable:$true] %s17
      %23 = dma.hbm_to_vmem [thread:$0]  %s16, 1024, %s18, [#allocation3], 64, 64, 4
    $region5: #{tpu_custom_call.1} parent=1 // pred_fallthru
      _
    // Predicated region
    $region6: #{tpu_custom_call.1} parent=1 // pred_check
      _
    $region7: #{tpu_custom_call.1} parent=1 // pred_check_branch
      %25 = sbr.rel (0) target = $region9
    $region8: #{tpu_custom_call.1} parent=1 // pred_region
      %27 = vsyncadd [#allocation6], 0
      %s28 = sshll.u32 %s1, 4
      %s29 = int_to_ptr.hbm [resolvable:$true] %s28
      %s30 = sshll.u32 [#allocation5], 4
      %s31 = int_to_ptr.vmem [resolvable:$true] %s30
      %36 = dma.hbm_to_vmem [thread:$0]  %s29, 1024, %s31, [#allocation6], 64, 64, 4
    $region9: #{tpu_custom_call.1} parent=1 // pred_fallthru
      _
    // Predicated region
    $region10: #{tpu_custom_call.1} parent=1 // pred_check
      _
    $region11: #{tpu_custom_call.1} parent=1 // pred_check_branch
      %38 = sbr.rel (0) target = $region13
    $region12: #{tpu_custom_call.1} parent=1 // pred_region
      _
    $region13: #{tpu_custom_call.1} parent=1 // pred_fallthru
      _
    // Predicated region
    $region14: #{tpu_custom_call.1} parent=1 // pred_check
      _
    $region15: #{tpu_custom_call.1} parent=1 // pred_check_branch
      %40 = sbr.rel (0) target = $region17
    $region16: #{tpu_custom_call.1} parent=1 // pred_region
      %42 = dma.done [#allocation3], 1024
    $region17: #{tpu_custom_call.1} parent=1 // pred_fallthru
      _
    // Predicated region
    $region18: #{tpu_custom_call.1} parent=1 // pred_check
      _
    $region19: #{tpu_custom_call.1} parent=1 // pred_check_branch
      %44 = sbr.rel (0) target = $region21
    $region20: #{tpu_custom_call.1} parent=1 // pred_region
      %46 = dma.done [#allocation6], 1024
    $region21: #{tpu_custom_call.1} parent=1 // pred_fallthru
      _
    %v47 = vld [vmem:[#allocation2] sm:$0xf]
    %v48 = vld [vmem:[#allocation2 + $0x4] sm:$0xf]
    %v49 = vld [vmem:[#allocation2 + $0x8] sm:$0xf]
    %v50 = vld [vmem:[#allocation2 + $0xc] sm:$0xf]
    %v51 = vld [vmem:[#allocation2 + $0x10] sm:$0xf]
    %v52 = vld [vmem:[#allocation2 + $0x14] sm:$0xf]
    %v53 = vld [vmem:[#allocation2 + $0x18] sm:$0xf]
    %v54 = vld [vmem:[#allocation2 + $0x1c] sm:$0xf]
    %v55 = vld [vmem:[#allocation2 + $0x20] sm:$0xf]
    %v56 = vld [vmem:[#allocation2 + $0x24] sm:$0xf]
    %v57 = vld [vmem:[#allocation2 + $0x28] sm:$0xf]
    %v58 = vld [vmem:[#allocation2 + $0x2c] sm:$0xf]
    %v59 = vld [vmem:[#allocation2 + $0x30] sm:$0xf]
    %v60 = vld [vmem:[#allocation2 + $0x34] sm:$0xf]
    %v61 = vld [vmem:[#allocation2 + $0x38] sm:$0xf]
    %v62 = vld [vmem:[#allocation2 + $0x3c] sm:$0xf]
    %v63 = vld [vmem:[#allocation5] sm:$0xf]
    %v64 = vld [vmem:[#allocation5 + $0x4] sm:$0xf]
    %v65 = vld [vmem:[#allocation5 + $0x8] sm:$0xf]
    %v66 = vld [vmem:[#allocation5 + $0xc] sm:$0xf]
    %v67 = vld [vmem:[#allocation5 + $0x10] sm:$0xf]
    %v68 = vld [vmem:[#allocation5 + $0x14] sm:$0xf]
    %v69 = vld [vmem:[#allocation5 + $0x18] sm:$0xf]
    %v70 = vld [vmem:[#allocation5 + $0x1c] sm:$0xf]
    %v71 = vld [vmem:[#allocation5 + $0x20] sm:$0xf]
    %v72 = vld [vmem:[#allocation5 + $0x24] sm:$0xf]
    %v73 = vld [vmem:[#allocation5 + $0x28] sm:$0xf]
    %v74 = vld [vmem:[#allocation5 + $0x2c] sm:$0xf]
    %v75 = vld [vmem:[#allocation5 + $0x30] sm:$0xf]
    %v76 = vld [vmem:[#allocation5 + $0x34] sm:$0xf]
    %v77 = vld [vmem:[#allocation5 + $0x38] sm:$0xf]
    %v78 = vld [vmem:[#allocation5 + $0x3c] sm:$0xf]
    %v79 = vld [vmem:[%s2] sm:$0x1]
    %v81 = vperm.slane %v79, 0
    %v99 = vunpack.c.l.b16 %v47
    %v100 = vunpack.c.l.b16 %v48
    %v101 = vunpack.c.l.b16 %v49
    %v102 = vunpack.c.l.b16 %v50
    %v103 = vunpack.c.l.b16 %v51
    %v104 = vunpack.c.l.b16 %v52
    %v105 = vunpack.c.l.b16 %v53
    %v106 = vunpack.c.l.b16 %v54
    %v107 = vunpack.c.l.b16 %v55
    %v108 = vunpack.c.l.b16 %v56
    %v109 = vunpack.c.l.b16 %v57
    %v110 = vunpack.c.l.b16 %v58
    %v111 = vunpack.c.l.b16 %v59
    %v112 = vunpack.c.l.b16 %v60
    %v113 = vunpack.c.l.b16 %v61
    %v114 = vunpack.c.l.b16 %v62
    %v115 = vpack.c.b16 %v100, %v99
    %v116 = vpack.c.b16 %v102, %v101
    %v117 = vpack.c.b16 %v104, %v103
    %v118 = vpack.c.b16 %v106, %v105
    %v119 = vpack.c.b16 %v108, %v107
    %v120 = vpack.c.b16 %v110, %v109
    %v121 = vpack.c.b16 %v112, %v111
    %v122 = vpack.c.b16 %v114, %v113
    %v147 = vunpack.c.l.b16 %v63
    %v148 = vunpack.c.l.b16 %v64
    %v149 = vunpack.c.l.b16 %v65
    %v150 = vunpack.c.l.b16 %v66
    %v151 = vunpack.c.l.b16 %v67
    %v152 = vunpack.c.l.b16 %v68
    %v153 = vunpack.c.l.b16 %v69
    %v154 = vunpack.c.l.b16 %v70
    %v155 = vunpack.c.l.b16 %v71
    %v156 = vunpack.c.l.b16 %v72
    %v157 = vunpack.c.l.b16 %v73
    %v158 = vunpack.c.l.b16 %v74
    %v159 = vunpack.c.l.b16 %v75
    %v160 = vunpack.c.l.b16 %v76
    %v161 = vunpack.c.l.b16 %v77
    %v162 = vunpack.c.l.b16 %v78
    %v163 = vpack.c.b16 %v148, %v147
    %v164 = vpack.c.b16 %v150, %v149
    %v165 = vpack.c.b16 %v152, %v151
    %v166 = vpack.c.b16 %v154, %v153
    %v167 = vpack.c.b16 %v156, %v155
    %v168 = vpack.c.b16 %v158, %v157
    %v169 = vpack.c.b16 %v160, %v159
    %v170 = vpack.c.b16 %v162, %v161
    %179 = vmatpush.bf16.msra.mxu0 %v170
    %180 = vmatpush.bf16.msra.mxu0 %v169
    %181 = vmatpush.bf16.msra.mxu0 %v168
    %182 = vmatpush.bf16.msra.mxu0 %v167
    %183 = vmatpush.bf16.msra.mxu0 %v166
    %184 = vmatpush.bf16.msra.mxu0 %v165
    %185 = vmatpush.bf16.msra.mxu0 %v164
    %186 = vmatpush.bf16.msra.mxu0 %v163
    %187 = vmatmul.bf16.gmra.mxu0 %v115
    %v188 = vpop.f32.mrf.mxu0
    %v189 = vadd.f32 %v81, %v188
    %v190 = vpop.f32.mrf.mxu0
    %v191 = vadd.f32 %v81, %v190
    %192 = vmatmul.bf16.gmra.mxu0 %v116
    %v193 = vpop.f32.mrf.mxu0
    %v194 = vadd.f32 %v81, %v193
    %v195 = vpop.f32.mrf.mxu0
    %v196 = vadd.f32 %v81, %v195
    %197 = vmatmul.bf16.gmra.mxu0 %v117
    %v198 = vpop.f32.mrf.mxu0
    %v199 = vadd.f32 %v81, %v198
    %v200 = vpop.f32.mrf.mxu0
    %v201 = vadd.f32 %v81, %v200
    %202 = vmatmul.bf16.gmra.mxu0 %v118
    %v203 = vpop.f32.mrf.mxu0
    %v204 = vadd.f32 %v81, %v203
    %v205 = vpop.f32.mrf.mxu0
    %v206 = vadd.f32 %v81, %v205
    %207 = vmatmul.bf16.gmra.mxu0 %v119
    %v208 = vpop.f32.mrf.mxu0
    %v209 = vadd.f32 %v81, %v208
    %v210 = vpop.f32.mrf.mxu0
    %v211 = vadd.f32 %v81, %v210
    %212 = vmatmul.bf16.gmra.mxu0 %v120
    %v213 = vpop.f32.mrf.mxu0
    %v214 = vadd.f32 %v81, %v213
    %v215 = vpop.f32.mrf.mxu0
    %v216 = vadd.f32 %v81, %v215
    %217 = vmatmul.bf16.gmra.mxu0 %v121
    %v218 = vpop.f32.mrf.mxu0
    %v219 = vadd.f32 %v81, %v218
    %v220 = vpop.f32.mrf.mxu0
    %v221 = vadd.f32 %v81, %v220
    %222 = vmatmul.bf16.gmra.mxu0 %v122
    %v223 = vpop.f32.mrf.mxu0
    %v224 = vadd.f32 %v81, %v223
    %v225 = vpop.f32.mrf.mxu0
    %v226 = vadd.f32 %v81, %v225
    %227 = vdwg.mxu0
    %v228 = vmax.f32 %v189, 0.0
    %v229 = vmax.f32 %v191, 0.0
    %v230 = vmax.f32 %v194, 0.0
    %v231 = vmax.f32 %v196, 0.0
    %v232 = vmax.f32 %v199, 0.0
    %v233 = vmax.f32 %v201, 0.0
    %v234 = vmax.f32 %v204, 0.0
    %v235 = vmax.f32 %v206, 0.0
    %v236 = vmax.f32 %v209, 0.0
    %v237 = vmax.f32 %v211, 0.0
    %v238 = vmax.f32 %v214, 0.0
    %v239 = vmax.f32 %v216, 0.0
    %v240 = vmax.f32 %v219, 0.0
    %v241 = vmax.f32 %v221, 0.0
    %v242 = vmax.f32 %v224, 0.0
    %v243 = vmax.f32 %v226, 0.0
    %v244 = vpack.c.bf16 %v228, %v228
    %v245 = vpack.c.bf16 %v229, %v229
    %v246 = vpack.c.bf16 %v230, %v230
    %v247 = vpack.c.bf16 %v231, %v231
    %v248 = vpack.c.bf16 %v232, %v232
    %v249 = vpack.c.bf16 %v233, %v233
    %v250 = vpack.c.bf16 %v234, %v234
    %v251 = vpack.c.bf16 %v235, %v235
    %v252 = vpack.c.bf16 %v236, %v236
    %v253 = vpack.c.bf16 %v237, %v237
    %v254 = vpack.c.bf16 %v238, %v238
    %v255 = vpack.c.bf16 %v239, %v239
    %v256 = vpack.c.bf16 %v240, %v240
    %v257 = vpack.c.bf16 %v241, %v241
    %v258 = vpack.c.bf16 %v242, %v242
    %v259 = vpack.c.bf16 %v243, %v243
    %260 = vst [vmem:[#allocation7] sm:$0xf] %v244
    %261 = vst [vmem:[#allocation7 + $0x4] sm:$0xf] %v245
    %262 = vst [vmem:[#allocation7 + $0x8] sm:$0xf] %v246
    %263 = vst [vmem:[#allocation7 + $0xc] sm:$0xf] %v247
    %264 = vst [vmem:[#allocation7 + $0x10] sm:$0xf] %v248
    %265 = vst [vmem:[#allocation7 + $0x14] sm:$0xf] %v249
    %266 = vst [vmem:[#allocation7 + $0x18] sm:$0xf] %v250
    %267 = vst [vmem:[#allocation7 + $0x1c] sm:$0xf] %v251
    %268 = vst [vmem:[#allocation7 + $0x20] sm:$0xf] %v252
    %269 = vst [vmem:[#allocation7 + $0x24] sm:$0xf] %v253
    %270 = vst [vmem:[#allocation7 + $0x28] sm:$0xf] %v254
    %271 = vst [vmem:[#allocation7 + $0x2c] sm:$0xf] %v255
    %272 = vst [vmem:[#allocation7 + $0x30] sm:$0xf] %v256
    %273 = vst [vmem:[#allocation7 + $0x34] sm:$0xf] %v257
    %274 = vst [vmem:[#allocation7 + $0x38] sm:$0xf] %v258
    %275 = vst [vmem:[#allocation7 + $0x3c] sm:$0xf] %v259
    // Predicated region
    $region22: #{tpu_custom_call.1} parent=1 // pred_check
      _
    $region23: #{tpu_custom_call.1} parent=1 // pred_check_branch
      %277 = sbr.rel (0) target = $region25
    $region24: #{tpu_custom_call.1} parent=1 // pred_region
      %279 = vsyncadd [#allocation4], 0
      %s280 = sshll.u32 [#allocation7], 4
      %s281 = int_to_ptr.vmem [resolvable:$true] %s280
      %s282 = sshll.u32 %s3, 4
      %s283 = int_to_ptr.hbm [resolvable:$true] %s282
      %288 = dma.vmem_to_hbm [thread:$0]  %s281, 1024, %s283, [#allocation4], 64, 64, 4
    $region25: #{tpu_custom_call.1} parent=1 // pred_fallthru
      _
    // Predicated region
    $region26: #{tpu_custom_call.1} parent=1 // pred_check
      _
    $region27: #{tpu_custom_call.1} parent=1 // pred_check_branch
      %290 = sbr.rel (0) target = $region29
    $region28: #{tpu_custom_call.1} parent=1 // pred_region
      %292 = dma.done [#allocation4], 1024
    $region29: #{tpu_custom_call.1} parent=1 // pred_fallthru
      _
    %293 = vsyncpa [#allocation3], 1
    %294 = vsyncpa [#allocation6], 1
    %295 = vsyncpa [#allocation4], 1

</llo_original>
